<compile_context>
chip_gen: v5e
topology: v5e:2x2
jax: 0.10.0
libtpu: 0.0.40
codegen_flags: <defaults>
</compile_context>

<pallas_src>
import functools

import jax
import jax.numpy as jnp
from jax import lax
from jax.experimental import pallas as pl
from jax.experimental.pallas import tpu as pltpu


def _round_up(x, m):
    return (x + m - 1) // m * m


def rnn_classify_kernel(ids_ref,     # (Tc, Btile, 1) int32  token ids (time-major chunk)
                        proj_ref,    # (Vp, Ep)  mm_dtype    emb_table @ W_ih + b (pre-projected)
                        w_hh_ref,    # (Ep, Ep)  mm_dtype    hidden->hidden (pre-transposed)
                        w_cls_ref,   # (Ep, Vp)  mm_dtype    classifier weight (pre-transposed)
                        b_cls_ref,   # (1, Vp)   f32         classifier bias
                        out_ref,     # (Btile, Vp) f32       logits (padded)
                        xproj_ref,   # (Tc*Btile, Ep) f32    scratch: per-chunk input projection
                        h_ref,       # (Btile, Ep) f32       scratch: hidden state (chunk-carried)
                        hsum_ref,    # (Btile, Ep) f32       scratch: running sum over time
                        *, seq_len, padded_seq_len):
    c = pl.program_id(1)                       # time-chunk index (grid axis 1, "arbitrary")

    Tc, Btile, _ = ids_ref.shape
    Vp = out_ref.shape[1]
    Ep = h_ref.shape[1]
    mm_dtype = proj_ref.dtype

    @pl.when(c == 0)
    def _():
        h_ref[...] = jnp.zeros_like(h_ref)
        hsum_ref[...] = jnp.zeros_like(hsum_ref)

    # Embedding gather + input projection as ONE MXU matmul against the
    # VMEM-resident pre-projected table: onehot(ids) @ proj_table.
    ids = ids_ref[...].reshape(Tc * Btile, 1)
    onehot = (lax.broadcasted_iota(jnp.int32, (Tc * Btile, Vp), 1)
              == ids).astype(mm_dtype)
    xproj_ref[...] = jnp.dot(onehot, proj_ref[...],
                             preferred_element_type=jnp.float32)

    # Keep W_hh resident in vregs only while it fits comfortably (<= 16 vregs).
    if Ep <= 128:
        w_hh = w_hh_ref[...]
        read_whh = lambda: w_hh
    else:
        read_whh = lambda: w_hh_ref[...]

    needs_mask = padded_seq_len != seq_len

    def step(t, carry):
        h, hsum = carry
        row = pl.multiple_of(t * Btile, 8)
        x_t = xproj_ref[pl.ds(row, Btile), :]                    # sublane-aligned load
        h_new = jnp.tanh(x_t + jnp.dot(h.astype(mm_dtype), read_whh(),
                                       preferred_element_type=jnp.float32))
        if needs_mask:
            # Exclude padded trailing time steps from the mean; h itself can go
            # stale there (only further padded steps ever see it).
            valid = ((c * Tc + t) < seq_len).astype(jnp.float32)
            hsum = hsum + valid * h_new
        else:
            hsum = hsum + h_new
        return h_new, hsum

    h, hsum = lax.fori_loop(0, Tc, step, (h_ref[...], hsum_ref[...]),
                            unroll=min(Tc, 8))
    h_ref[...] = h
    hsum_ref[...] = hsum

    @pl.when(c == pl.num_programs(1) - 1)
    def _():
        rnn_mean = hsum * (1.0 / seq_len)                        # mean over real time steps
        logits = (jnp.dot(rnn_mean.astype(mm_dtype), w_cls_ref[...],
                          preferred_element_type=jnp.float32)
                  + b_cls_ref[...])
        out_ref[...] = logits.astype(out_ref.dtype)              # lane-dense store (Vp % 128 == 0)


def model_forward(token_ids, params, *, time_chunk=64, batch_tile=128,
                  matmul_dtype=jnp.float32):
    """Forward pass equivalent to Model.forward(batch_token_ids) (no labels)."""
    emb_table = params["emb_table"]    # (V, E)
    w_ih = params["w_ih"]              # (E, E)  already transposed for x @ W
    w_hh = params["w_hh"]              # (E, E)  already transposed for h @ W
    b_rnn = params["b_rnn"]            # (1, E)  b_ih + b_hh
    w_cls = params["w_cls"]            # (E, V)  already transposed
    b_cls = params["b_cls"]            # (1, V)

    B, T = token_ids.shape
    V, E = emb_table.shape

    Ep = _round_up(E, 128)                               # lane-dense hidden dim
    Vp = _round_up(V, 128)                               # lane-dense vocab dim
    Btile = min(_round_up(batch_tile, 8), _round_up(B, 8))
    Bp = _round_up(_round_up(B, 8), Btile)               # sublane-aligned, tileable batch
    Tc = max(1, min(time_chunk, T))                      # time-chunk length
    Tp = _round_up(T, Tc)

    num_btiles = Bp // Btile
    num_chunks = Tp // Tc

    # Fold the input projection into the embedding table (done once, outside
    # the serial recurrence): proj_table[v] = emb_table[v] @ W_ih + b.
    proj = emb_table @ w_ih + b_rnn                                      # (V, E) f32
    proj_p = jnp.pad(proj, ((0, Vp - V), (0, Ep - E))).astype(matmul_dtype)
    w_hh_p = jnp.pad(w_hh, ((0, Ep - E), (0, Ep - E))).astype(matmul_dtype)
    w_cls_p = jnp.pad(w_cls, ((0, Ep - E), (0, Vp - V))).astype(matmul_dtype)
    b_cls_p = jnp.pad(b_cls, ((0, 0), (0, Vp - V)))                      # f32

    # Time-major token ids, (Tp, Bp, 1): each grid step DMAs only one small
    # (Tc, Btile, 1) int32 chunk (no (T*B, E) f32 slab through HBM).
    ids_tm = jnp.pad(token_ids, ((0, Bp - B), (0, Tp - T)))              # (Bp, Tp)
    ids_tm = ids_tm.T.reshape(Tp, Bp, 1).astype(jnp.int32)

    out = pl.pallas_call(
        functools.partial(rnn_classify_kernel, seq_len=T, padded_seq_len=Tp),
        out_shape=jax.ShapeDtypeStruct((Bp, Vp), jnp.float32),
        grid_spec=pltpu.PrefetchScalarGridSpec(
            num_scalar_prefetch=0,
            grid=(num_btiles, num_chunks),
            in_specs=[
                pl.BlockSpec((Tc, Btile, 1), lambda b, c: (c, b, 0)),    # ids chunk
                pl.BlockSpec((Vp, Ep), lambda b, c: (0, 0)),             # proj table (resident)
                pl.BlockSpec((Ep, Ep), lambda b, c: (0, 0)),             # W_hh (resident)
                pl.BlockSpec((Ep, Vp), lambda b, c: (0, 0)),             # W_cls (resident)
                pl.BlockSpec((1, Vp), lambda b, c: (0, 0)),              # b_cls (resident)
            ],
            out_specs=pl.BlockSpec((Btile, Vp), lambda b, c: (b, 0)),    # resident across time
            scratch_shapes=[
                pltpu.VMEM((Tc * Btile, Ep), jnp.float32),               # per-chunk xproj
                pltpu.VMEM((Btile, Ep), jnp.float32),                    # h
                pltpu.VMEM((Btile, Ep), jnp.float32),                    # sum_t h
            ],
        ),
        compiler_params=pltpu.CompilerParams(
            dimension_semantics=("parallel", "arbitrary")),
    )(ids_tm, proj_p, w_hh_p, w_cls_p, b_cls_p)

    return out[:B, :V]


def reference_forward(token_ids, params):
    """Pure-JAX reference of the same forward pass (for validation)."""
    emb = jnp.take(params["emb_table"], token_ids, axis=0)               # (B, T, E)
    B, T, E = emb.shape

    def step(h, x_t):
        h = jnp.tanh(x_t @ params["w_ih"] + h @ params["w_hh"]
                     + params["b_rnn"][0])
        return h, h

    h0 = jnp.zeros((B, E), jnp.float32)
    _, hs = lax.scan(step, h0, jnp.transpose(emb, (1, 0, 2)))            # (T, B, E)
    rnn_mean = hs.mean(axis=0)
    return rnn_mean @ params["w_cls"] + params["b_cls"][0]


def init_params(key, vocab_size, emb_dim):
    ks = jax.random.split(key, 6)
    scale = 0.1
    emb_table = scale * jax.random.normal(ks[0], (vocab_size, emb_dim),
                                          jnp.float32)
    # PyTorch stores W_ih (H, E) and applies x @ W_ih^T; we pre-transpose.
    w_ih = scale * jax.random.normal(ks[1], (emb_dim, emb_dim), jnp.float32)
    w_hh = scale * jax.random.normal(ks[2], (emb_dim, emb_dim), jnp.float32)
    b_ih = scale * jax.random.normal(ks[3], (emb_dim,), jnp.float32)
    b_hh = scale * jax.random.normal(ks[4], (emb_dim,), jnp.float32)
    w_cls = scale * jax.random.normal(ks[5], (emb_dim, vocab_size),
                                      jnp.float32)
    b_cls = jnp.zeros((vocab_size,), jnp.float32)
    return {
        "emb_table": emb_table,
        "w_ih": w_ih,
        "w_hh": w_hh,
        "b_rnn": (b_ih + b_hh).reshape(1, emb_dim),
        "w_cls": w_cls,
        "b_cls": b_cls.reshape(1, vocab_size),
    }


if __name__ == "__main__":
    # TODO(synk): CrossEntropyLoss branch (training path) not implemented;
    # forward returns logits exactly as the no-label path of Model.forward.
    vocab_size = 64
    emb_dim = 32
    batch = 2
    seq_len = 8

    key = jax.random.PRNGKey(0)
    pkey, dkey = jax.random.split(key)
    params = init_params(pkey, vocab_size, emb_dim)
    token_ids = jax.random.randint(dkey, (batch, seq_len), 0, vocab_size,
                                   dtype=jnp.int32)

    ref = reference_forward(token_ids, params)

    # f32 MXU-operand path; time_chunk=3 exercises multi-chunk scratch carry
    # and trailing-time-step masking (Tp=9 > T=8).
    fwd_f32 = jax.jit(functools.partial(model_forward, time_chunk=3,
                                        matmul_dtype=jnp.float32))
    logits = fwd_f32(token_ids, params)
    jax.block_until_ready(logits)
    assert logits.shape == (batch, vocab_size)
    assert logits.dtype == jnp.float32
    assert bool(jnp.allclose(logits, ref, rtol=1e-2, atol=1e-2)), \
        "Pallas kernel (f32) disagrees with pure-JAX reference"

    # bf16 MXU-operand fast path (v6e/v7x), f32 accumulation and f32 tanh/sums.
    fwd_bf16 = jax.jit(functools.partial(model_forward,
                                         matmul_dtype=jnp.bfloat16))
    logits_bf16 = fwd_bf16(token_ids, params)
    jax.block_until_ready(logits_bf16)
    assert bool(jnp.allclose(logits_bf16, ref, rtol=5e-2, atol=5e-2)), \
        "Pallas kernel (bf16 operands) disagrees with pure-JAX reference"

    print("KERNEL_OK")
</pallas_src>

<mosaic_0001>
module attributes {stable_mosaic.version = 11 : i64} {
  func.func @rnn_classify_kernel(%arg0: i32, %arg1: i32, %arg2: memref<3x8x1xi32, #tpu.memory_space<vmem>>, %arg3: memref<128x128xf32, #tpu.memory_space<vmem>>, %arg4: memref<128x128xf32, #tpu.memory_space<vmem>>, %arg5: memref<128x128xf32, #tpu.memory_space<vmem>>, %arg6: memref<1x128xf32, #tpu.memory_space<vmem>>, %arg7: memref<8x128xf32, #tpu.memory_space<vmem>>, %arg8: memref<24x128xf32, #tpu.memory_space<vmem>>, %arg9: memref<8x128xf32, #tpu.memory_space<vmem>>, %arg10: memref<8x128xf32, #tpu.memory_space<vmem>>) attributes {dimension_semantics = [#tpu.dimension_semantics<parallel>, #tpu.dimension_semantics<arbitrary>], iteration_bounds = array<i64: 1, 3>, scalar_prefetch = 0 : i64, scratch_operands = 3 : i64, tpu.core_type = #tpu.core_type<tc>, window_params = [{transform_indices = @transform_0, window_bounds = array<i64: 3, 8, 1>}, {pipeline_mode = #tpu.pipeline_mode<synchronous>, transform_indices = @transform_1, window_bounds = array<i64: 128, 128>}, {pipeline_mode = #tpu.pipeline_mode<synchronous>, transform_indices = @transform_2, window_bounds = array<i64: 128, 128>}, {pipeline_mode = #tpu.pipeline_mode<synchronous>, transform_indices = @transform_3, window_bounds = array<i64: 128, 128>}, {pipeline_mode = #tpu.pipeline_mode<synchronous>, transform_indices = @transform_4, window_bounds = array<i64: 1, 128>}, {transform_indices = @transform_5, window_bounds = array<i64: 8, 128>}]} {
    %c0_i32 = arith.constant 0 : i32
    %0 = arith.cmpi eq, %arg1, %c0_i32 : i32
    %1 = arith.extui %0 : i1 to i32
    %c0_i32_0 = arith.constant 0 : i32
    %2 = arith.cmpi ne, %1, %c0_i32_0 : i32
    scf.if %2 {
      %cst_34 = arith.constant 0.000000e+00 : f32
      %66 = vector.broadcast %cst_34 : f32 to vector<8x128xf32>
      %c0_35 = arith.constant 0 : index
      %c0_36 = arith.constant 0 : index
      %67 = vector.load %arg9[%c0_35, %c0_36] : memref<8x128xf32, #tpu.memory_space<vmem>>, vector<8x128xf32>
      tpu.vector_store %arg9[%c0_35, %c0_36], %66 {strides = array<i32>} : memref<8x128xf32, #tpu.memory_space<vmem>>, vector<8x128xf32>,
      %cst_37 = arith.constant 0.000000e+00 : f32
      %68 = vector.broadcast %cst_37 : f32 to vector<8x128xf32>
      %c0_38 = arith.constant 0 : index
      %c0_39 = arith.constant 0 : index
      %69 = vector.load %arg10[%c0_38, %c0_39] : memref<8x128xf32, #tpu.memory_space<vmem>>, vector<8x128xf32>
      tpu.vector_store %arg10[%c0_38, %c0_39], %68 {strides = array<i32>} : memref<8x128xf32, #tpu.memory_space<vmem>>, vector<8x128xf32>,
    } else {
    }
    %c0 = arith.constant 0 : index
    %c0_1 = arith.constant 0 : index
    %c0_2 = arith.constant 0 : index
    %3 = vector.load %arg2[%c0, %c0_1, %c0_2] : memref<3x8x1xi32, #tpu.memory_space<vmem>>, vector<3x8x1xi32>
    %4 = vector.shape_cast %3 : vector<3x8x1xi32> to vector<24x1xi32>
    %5 = tpu.iota {dimensions = array<i32: 1>} : vector<24x128xi32>
    %6 = vector.broadcast %4 : vector<24x1xi32> to vector<24x128xi32>
    %7 = arith.cmpi eq, %5, %6 : vector<24x128xi32>
    %8 = arith.extui %7 : vector<24x128xi1> to vector<24x128xi32>
    %9 = arith.sitofp %8 : vector<24x128xi32> to vector<24x128xf32>
    %c0_3 = arith.constant 0 : index
    %c0_4 = arith.constant 0 : index
    %10 = vector.load %arg3[%c0_3, %c0_4] : memref<128x128xf32, #tpu.memory_space<vmem>>, vector<128x128xf32>
    %cst = arith.constant dense<0.000000e+00> : vector<24x128xf32>
    %11 = tpu.matmul %9, %10, %cst {dimension_numbers = #tpu.dot_dimension_numbers<[1], [0], [0], [1], [0, 0, 1, 1], [], []>} : vector<24x128xf32>, vector<128x128xf32>, vector<24x128xf32> -> vector<24x128xf32>
    %c0_5 = arith.constant 0 : index
    %c0_6 = arith.constant 0 : index
    %12 = vector.load %arg8[%c0_5, %c0_6] : memref<24x128xf32, #tpu.memory_space<vmem>>, vector<24x128xf32>
    tpu.vector_store %arg8[%c0_5, %c0_6], %11 {strides = array<i32>} : memref<24x128xf32, #tpu.memory_space<vmem>>, vector<24x128xf32>,
    %c0_7 = arith.constant 0 : index
    %c0_8 = arith.constant 0 : index
    %13 = vector.load %arg4[%c0_7, %c0_8] : memref<128x128xf32, #tpu.memory_space<vmem>>, vector<128x128xf32>
    %c0_9 = arith.constant 0 : index
    %c0_10 = arith.constant 0 : index
    %14 = vector.load %arg9[%c0_9, %c0_10] : memref<8x128xf32, #tpu.memory_space<vmem>>, vector<8x128xf32>
    %c0_11 = arith.constant 0 : index
    %c0_12 = arith.constant 0 : index
    %15 = vector.load %arg10[%c0_11, %c0_12] : memref<8x128xf32, #tpu.memory_space<vmem>>, vector<8x128xf32>
    %c0_i32_13 = arith.constant 0 : i32
    %c8_i32 = arith.constant 8 : i32
    %16 = arith.muli %c0_i32_13, %c8_i32 : i32
    %17 = tpu.assume_multiple %16, 8 : i32
    %18 = arith.index_cast %17 : i32 to index
    %c0_14 = arith.constant 0 : index
    %19 = vector.load %arg8[%18, %c0_14] : memref<24x128xf32, #tpu.memory_space<vmem>>, vector<8x128xf32>
    %cst_15 = arith.constant dense<0.000000e+00> : vector<8x128xf32>
    %20 = tpu.matmul %14, %13, %cst_15 {dimension_numbers = #tpu.dot_dimension_numbers<[1], [0], [0], [1], [0, 0, 1, 1], [], []>} : vector<8x128xf32>, vector<128x128xf32>, vector<8x128xf32> -> vector<8x128xf32>
    %21 = arith.addf %19, %20 : vector<8x128xf32>
    %22 = math.tanh %21 : vector<8x128xf32>
    %c3_i32 = arith.constant 3 : i32
    %23 = arith.muli %arg1, %c3_i32 : i32
    %24 = arith.addi %23, %c0_i32_13 : i32
    %c8_i32_16 = arith.constant 8 : i32
    %25 = arith.cmpi slt, %24, %c8_i32_16 : i32
    %26 = arith.extui %25 : i1 to i32
    %27 = arith.sitofp %26 : i32 to f32
    %28 = vector.broadcast %27 : f32 to vector<8x128xf32>
    %29 = arith.mulf %28, %22 : vector<8x128xf32>
    %30 = arith.addf %15, %29 : vector<8x128xf32>
    %c1_i32 = arith.constant 1 : i32
    %c8_i32_17 = arith.constant 8 : i32
    %31 = arith.muli %c1_i32, %c8_i32_17 : i32
    %32 = tpu.assume_multiple %31, 8 : i32
    %33 = arith.index_cast %32 : i32 to index
    %c0_18 = arith.constant 0 : index
    %34 = vector.load %arg8[%33, %c0_18] : memref<24x128xf32, #tpu.memory_space<vmem>>, vector<8x128xf32>
    %cst_19 = arith.constant dense<0.000000e+00> : vector<8x128xf32>
    %35 = tpu.matmul %22, %13, %cst_19 {dimension_numbers = #tpu.dot_dimension_numbers<[1], [0], [0], [1], [0, 0, 1, 1], [], []>} : vector<8x128xf32>, vector<128x128xf32>, vector<8x128xf32> -> vector<8x128xf32>
    %36 = arith.addf %34, %35 : vector<8x128xf32>
    %37 = math.tanh %36 : vector<8x128xf32>
    %c3_i32_20 = arith.constant 3 : i32
    %38 = arith.muli %arg1, %c3_i32_20 : i32
    %39 = arith.addi %38, %c1_i32 : i32
    %c8_i32_21 = arith.constant 8 : i32
    %40 = arith.cmpi slt, %39, %c8_i32_21 : i32
    %41 = arith.extui %40 : i1 to i32
    %42 = arith.sitofp %41 : i32 to f32
    %43 = vector.broadcast %42 : f32 to vector<8x128xf32>
    %44 = arith.mulf %43, %37 : vector<8x128xf32>
    %45 = arith.addf %30, %44 : vector<8x128xf32>
    %c2_i32 = arith.constant 2 : i32
    %c8_i32_22 = arith.constant 8 : i32
    %46 = arith.muli %c2_i32, %c8_i32_22 : i32
    %47 = tpu.assume_multiple %46, 8 : i32
    %48 = arith.index_cast %47 : i32 to index
    %c0_23 = arith.constant 0 : index
    %49 = vector.load %arg8[%48, %c0_23] : memref<24x128xf32, #tpu.memory_space<vmem>>, vector<8x128xf32>
    %cst_24 = arith.constant dense<0.000000e+00> : vector<8x128xf32>
    %50 = tpu.matmul %37, %13, %cst_24 {dimension_numbers = #tpu.dot_dimension_numbers<[1], [0], [0], [1], [0, 0, 1, 1], [], []>} : vector<8x128xf32>, vector<128x128xf32>, vector<8x128xf32> -> vector<8x128xf32>
    %51 = arith.addf %49, %50 : vector<8x128xf32>
    %52 = math.tanh %51 : vector<8x128xf32>
    %c3_i32_25 = arith.constant 3 : i32
    %53 = arith.muli %arg1, %c3_i32_25 : i32
    %54 = arith.addi %53, %c2_i32 : i32
    %c8_i32_26 = arith.constant 8 : i32
    %55 = arith.cmpi slt, %54, %c8_i32_26 : i32
    %56 = arith.extui %55 : i1 to i32
    %57 = arith.sitofp %56 : i32 to f32
    %58 = vector.broadcast %57 : f32 to vector<8x128xf32>
    %59 = arith.mulf %58, %52 : vector<8x128xf32>
    %60 = arith.addf %45, %59 : vector<8x128xf32>
    %c3_i32_27 = arith.constant 3 : i32
    %c0_28 = arith.constant 0 : index
    %c0_29 = arith.constant 0 : index
    %61 = vector.load %arg9[%c0_28, %c0_29] : memref<8x128xf32, #tpu.memory_space<vmem>>, vector<8x128xf32>
    tpu.vector_store %arg9[%c0_28, %c0_29], %52 {strides = array<i32>} : memref<8x128xf32, #tpu.memory_space<vmem>>, vector<8x128xf32>,
    %c0_30 = arith.constant 0 : index
    %c0_31 = arith.constant 0 : index
    %62 = vector.load %arg10[%c0_30, %c0_31] : memref<8x128xf32, #tpu.memory_space<vmem>>, vector<8x128xf32>
    tpu.vector_store %arg10[%c0_30, %c0_31], %60 {strides = array<i32>} : memref<8x128xf32, #tpu.memory_space<vmem>>, vector<8x128xf32>,
    %c2_i32_32 = arith.constant 2 : i32
    %63 = arith.cmpi eq, %arg1, %c2_i32_32 : i32
    %64 = arith.extui %63 : i1 to i32
    %c0_i32_33 = arith.constant 0 : i32
    %65 = arith.cmpi ne, %64, %c0_i32_33 : i32
    scf.if %65 {
      %cst_34 = arith.constant 1.250000e-01 : f32
      %66 = vector.broadcast %cst_34 : f32 to vector<8x128xf32>
      %67 = arith.mulf %60, %66 : vector<8x128xf32>
      %c0_35 = arith.constant 0 : index
      %c0_36 = arith.constant 0 : index
      %68 = vector.load %arg5[%c0_35, %c0_36] : memref<128x128xf32, #tpu.memory_space<vmem>>, vector<128x128xf32>
      %cst_37 = arith.constant dense<0.000000e+00> : vector<8x128xf32>
      %69 = tpu.matmul %67, %68, %cst_37 {dimension_numbers = #tpu.dot_dimension_numbers<[1], [0], [0], [1], [0, 0, 1, 1], [], []>} : vector<8x128xf32>, vector<128x128xf32>, vector<8x128xf32> -> vector<8x128xf32>
      %c0_38 = arith.constant 0 : index
      %c0_39 = arith.constant 0 : index
      %70 = vector.load %arg6[%c0_38, %c0_39] : memref<1x128xf32, #tpu.memory_space<vmem>>, vector<1x128xf32>
      %71 = vector.broadcast %70 : vector<1x128xf32> to vector<8x128xf32>
      %72 = arith.addf %69, %71 : vector<8x128xf32>
      %c0_40 = arith.constant 0 : index
      %c0_41 = arith.constant 0 : index
      %73 = vector.load %arg7[%c0_40, %c0_41] : memref<8x128xf32, #tpu.memory_space<vmem>>, vector<8x128xf32>
      tpu.vector_store %arg7[%c0_40, %c0_41], %72 {strides = array<i32>} : memref<8x128xf32, #tpu.memory_space<vmem>>, vector<8x128xf32>,
    } else {
    }
    return
  }
  func.func @transform_0(%arg0: i32, %arg1: i32) -> (i32, i32, i32) {
    %c0_i32 = arith.constant 0 : i32
    %c0_i32_0 = arith.constant 0 : i32
    return %arg1, %arg0, %c0_i32 : i32, i32, i32
  }
  func.func @transform_1(%arg0: i32, %arg1: i32) -> (i32, i32) {
    %c0_i32 = arith.constant 0 : i32
    %c0_i32_0 = arith.constant 0 : i32
    %c0_i32_1 = arith.constant 0 : i32
    return %c0_i32, %c0_i32_0 : i32, i32
  }
  func.func @transform_2(%arg0: i32, %arg1: i32) -> (i32, i32) {
    %c0_i32 = arith.constant 0 : i32
    %c0_i32_0 = arith.constant 0 : i32
    %c0_i32_1 = arith.constant 0 : i32
    return %c0_i32, %c0_i32_0 : i32, i32
  }
  func.func @transform_3(%arg0: i32, %arg1: i32) -> (i32, i32) {
    %c0_i32 = arith.constant 0 : i32
    %c0_i32_0 = arith.constant 0 : i32
    %c0_i32_1 = arith.constant 0 : i32
    return %c0_i32, %c0_i32_0 : i32, i32
  }
  func.func @transform_4(%arg0: i32, %arg1: i32) -> (i32, i32) {
    %c0_i32 = arith.constant 0 : i32
    %c0_i32_0 = arith.constant 0 : i32
    %c0_i32_1 = arith.constant 0 : i32
    return %c0_i32, %c0_i32_0 : i32, i32
  }
  func.func @transform_5(%arg0: i32, %arg1: i32) -> (i32, i32) {
    %c0_i32 = arith.constant 0 : i32
    %c0_i32_0 = arith.constant 0 : i32
    return %arg0, %c0_i32 : i32, i32
  }
}

</mosaic_0001>

<llo_original>
// kernel: model_forward.1
$region0: #{model_forward.1}
  #allocation0 [shape = 'u32[]', space=smem, size = 0x4, offset = 0x4, fixed_abs, tag = 'smem constant byte address 0x4 - core index']
  #allocation1 [shape = 'u32[72,128]{1,0:T(1,128)}', space=vmem, size = 0x9000, scoped, tag = 'internal scratch']
  #allocation2 [shape = 'f32[24,128]{1,0:T(8,128)}', space=vmem, size = 0x3000, scoped, tag = 'scratch operand']
  #allocation3 [shape = 'f32[8,128]{1,0:T(8,128)}', space=vmem, size = 0x1000, scoped, tag = 'scratch operand']
  #allocation4 [shape = 'f32[8,128]{1,0:T(8,128)}', space=vmem, size = 0x1000, scoped, tag = 'scratch operand']
  %s0 = inlined_call_operand.vmem [shape: s32[9,8,1], index: 0, kind: input, shape index: {}]
  %s1 = inlined_call_operand.vmem [shape: f32[128,128], index: 1, kind: input, shape index: {}]
  %s2 = inlined_call_operand.vmem [shape: f32[128,128], index: 2, kind: input, shape index: {}]
  %s3 = inlined_call_operand.vmem [shape: f32[128,128], index: 3, kind: input, shape index: {}]
  %s4 = inlined_call_operand.vmem [shape: f32[1,128], index: 4, kind: input, shape index: {}]
  %s5 = inlined_call_operand.vmem [shape: f32[8,128], index: 5, kind: output, shape index: {}]
  %s6 = sld [smem:[#allocation0]]
  $region61: #{model_forward.1} parent=0
    _
  %s8 = ssub.s32 1, %s6
  %s9 = scalar_select 0, %s8, %s6
  loop: start=0, step=1, limit=5
  $region2: #{model_forward.1} parent=0 // loop_pre_header
    _
  $region3: #{model_forward.1} parent=0 // loop_header
    %s11 = sphi 0, %s15
    %p12 = scmp.ge.s32.totalorder %s11, 5
    %s18 = sphi 0, %s30
    %s19 = sphi 0, %s26
    %s20 = sphi 0, %s18
    %s21 = sphi 0, %s19
    %s22 = sphi 0, %s20
    %s23 = sphi 0, %s21
    %s35 = sphi 0, %s37
    %s38 = sphi 0, %s35
    %s39 = sphi 0, %s38
    %s55 = sphi 0, %s39
    %s59 = sphi 0, %s59
    %s61 = sphi 0, %s59
    %s62 = sphi 0, %s61
    %s76 = sphi 0, %s62
    %s80 = sphi 0, %s80
    %s82 = sphi 0, %s80
    %s83 = sphi 0, %s82
    %s97 = sphi 0, %s83
    %s101 = sphi 0, %s101
    %s103 = sphi 0, %s101
    %s104 = sphi 0, %s103
    %s118 = sphi 0, %s104
    %s122 = sphi 0, %s122
    %s124 = sphi 0, %s122
    %s125 = sphi 0, %s124
    %s139 = sphi 0, %s125
    %s145 = sphi 0, %s147
    %s148 = sphi 0, %s145
    %s149 = sphi 0, %s148
    %s165 = sphi 0, %s149
  $region4: #{model_forward.1} parent=0 // loop_header_branch
    %14 = sbr.rel (%p12) target = $region8
  $region5: #{model_forward.1} parent=0 // loop_body
    %s16 = ssub.s32 %s11, 1
    %s17 = ssub.s32 %s11, 2
    %s24 = sadd.s32 1, %s19
    %p25 = scmp.ge.s32.totalorder %s24, 3
    %s26 = scalar_select %p25, 0, %s24
    %s27 = sadd.s32 1, %s18
    %s28 = scalar_select %p25, %s27, %s18
    %p29 = scmp.ge.s32.totalorder %s28, 1
    %s30 = scalar_select %p29, 0, %s28
    %s31 = ssub.s32 %s19, %s26
    %s32 = ssub.s32 %s18, %s30
    %s33 = sor.u32 %s31, %s32
    %p34 = scmp.eq.s32.totalorder %s33, 0
    %s36 = sadd.s32 %s35, 1
    %s37 = scalar_select %p34, %s35, %s36
    %p40 = pneg %p34
    %p41 = scmp.eq.s32.totalorder %s11, 2
    %p42 = por %p40, %p41
    %p43 = scmp.ne.s32.totalorder %s35, %s38
    %p44 = scmp.eq.s32.totalorder %s11, 0
    %p45 = por %p43, %p44
    %p46 = scmp.ne.s32.totalorder %s35, %s38
    %p47 = scmp.eq.s32.totalorder %s16, 2
    %p48 = por %p46, %p47
    %p49 = scmp.ne.s32.totalorder %s38, %s39
    %p50 = scmp.eq.s32.totalorder %s16, 0
    %p51 = por %p49, %p50
    %p52 = scmp.ne.s32.totalorder %s38, %s39
    %p53 = scmp.eq.s32.totalorder %s17, 2
    %p54 = por %p52, %p53
    %p56 = scmp.ne.s32.totalorder %s39, %s55
    %p57 = scmp.eq.s32.totalorder %s17, 0
    %p58 = por %p56, %p57
    %s60 = sadd.s32 %s59, 1
    %p63 = scmp.eq.s32.totalorder %s11, 2
    %p64 = scmp.ne.s32.totalorder %s59, %s61
    %p65 = scmp.eq.s32.totalorder %s11, 0
    %p66 = por %p64, %p65
    %p67 = scmp.ne.s32.totalorder %s59, %s61
    %p68 = scmp.eq.s32.totalorder %s16, 2
    %p69 = por %p67, %p68
    %p70 = scmp.ne.s32.totalorder %s61, %s62
    %p71 = scmp.eq.s32.totalorder %s16, 0
    %p72 = por %p70, %p71
    %p73 = scmp.ne.s32.totalorder %s61, %s62
    %p74 = scmp.eq.s32.totalorder %s17, 2
    %p75 = por %p73, %p74
    %p77 = scmp.ne.s32.totalorder %s62, %s76
    %p78 = scmp.eq.s32.totalorder %s17, 0
    %p79 = por %p77, %p78
    %s81 = sadd.s32 %s80, 1
    %p84 = scmp.eq.s32.totalorder %s11, 2
    %p85 = scmp.ne.s32.totalorder %s80, %s82
    %p86 = scmp.eq.s32.totalorder %s11, 0
    %p87 = por %p85, %p86
    %p88 = scmp.ne.s32.totalorder %s80, %s82
    %p89 = scmp.eq.s32.totalorder %s16, 2
    %p90 = por %p88, %p89
    %p91 = scmp.ne.s32.totalorder %s82, %s83
    %p92 = scmp.eq.s32.totalorder %s16, 0
    %p93 = por %p91, %p92
    %p94 = scmp.ne.s32.totalorder %s82, %s83
    %p95 = scmp.eq.s32.totalorder %s17, 2
    %p96 = por %p94, %p95
    %p98 = scmp.ne.s32.totalorder %s83, %s97
    %p99 = scmp.eq.s32.totalorder %s17, 0
    %p100 = por %p98, %p99
    %s102 = sadd.s32 %s101, 1
    %p105 = scmp.eq.s32.totalorder %s11, 2
    %p106 = scmp.ne.s32.totalorder %s101, %s103
    %p107 = scmp.eq.s32.totalorder %s11, 0
    %p108 = por %p106, %p107
    %p109 = scmp.ne.s32.totalorder %s101, %s103
    %p110 = scmp.eq.s32.totalorder %s16, 2
    %p111 = por %p109, %p110
    %p112 = scmp.ne.s32.totalorder %s103, %s104
    %p113 = scmp.eq.s32.totalorder %s16, 0
    %p114 = por %p112, %p113
    %p115 = scmp.ne.s32.totalorder %s103, %s104
    %p116 = scmp.eq.s32.totalorder %s17, 2
    %p117 = por %p115, %p116
    %p119 = scmp.ne.s32.totalorder %s104, %s118
    %p120 = scmp.eq.s32.totalorder %s17, 0
    %p121 = por %p119, %p120
    %s123 = sadd.s32 %s122, 1
    %p126 = scmp.eq.s32.totalorder %s11, 2
    %p127 = scmp.ne.s32.totalorder %s122, %s124
    %p128 = scmp.eq.s32.totalorder %s11, 0
    %p129 = por %p127, %p128
    %p130 = scmp.ne.s32.totalorder %s122, %s124
    %p131 = scmp.eq.s32.totalorder %s16, 2
    %p132 = por %p130, %p131
    %p133 = scmp.ne.s32.totalorder %s124, %s125
    %p134 = scmp.eq.s32.totalorder %s16, 0
    %p135 = por %p133, %p134
    %p136 = scmp.ne.s32.totalorder %s124, %s125
    %p137 = scmp.eq.s32.totalorder %s17, 2
    %p138 = por %p136, %p137
    %p140 = scmp.ne.s32.totalorder %s125, %s139
    %p141 = scmp.eq.s32.totalorder %s17, 0
    %p142 = por %p140, %p141
    %s143 = ssub.s32 %s18, %s30
    %p144 = scmp.eq.s32.totalorder %s143, 0
    %s146 = sadd.s32 %s145, 1
    %s147 = scalar_select %p144, %s145, %s146
    %p150 = pneg %p144
    %p151 = scmp.eq.s32.totalorder %s11, 2
    %p152 = por %p150, %p151
    %p153 = scmp.ne.s32.totalorder %s145, %s148
    %p154 = scmp.eq.s32.totalorder %s11, 0
    %p155 = por %p153, %p154
    %p156 = scmp.ne.s32.totalorder %s145, %s148
    %p157 = scmp.eq.s32.totalorder %s16, 2
    %p158 = por %p156, %p157
    %p159 = scmp.ne.s32.totalorder %s148, %s149
    %p160 = scmp.eq.s32.totalorder %s16, 0
    %p161 = por %p159, %p160
    %p162 = scmp.ne.s32.totalorder %s148, %s149
    %p163 = scmp.eq.s32.totalorder %s17, 2
    %p164 = por %p162, %p163
    %p166 = scmp.ne.s32.totalorder %s149, %s165
    %p167 = scmp.eq.s32.totalorder %s17, 0
    %p168 = por %p166, %p167
    %p169 = scmp.le.s32.totalorder 1, %s11
    %p170 = scmp.lt.s32.totalorder %s11, 4
    %p171 = pnand %p169, %p170
    %p172 = pneg %p171
    // Predicated region
    $region9: #{model_forward.1} parent=5 // pred_check
      _
    $region10: #{model_forward.1} parent=5 // pred_check_branch
      %174 = sbr.rel (%p171) target = $region12
    $region11: #{model_forward.1} parent=5 // pred_region
      %s175 = ssub.s32 %s11, 1
      // Predicated region
      $region13: #{model_forward.1} parent=11 // pred_check
        %p176 = pneg %p72
      $region14: #{model_forward.1} parent=11 // pred_check_branch
        %178 = sbr.rel (%p176) target = $region16
      $region15: #{model_forward.1} parent=11 // pred_region
        _
      $region16: #{model_forward.1} parent=11 // pred_fallthru
        _
      // Predicated region
      $region17: #{model_forward.1} parent=11 // pred_check
        %p179 = pneg %p93
      $region18: #{model_forward.1} parent=11 // pred_check_branch
        %181 = sbr.rel (%p179) target = $region20
      $region19: #{model_forward.1} parent=11 // pred_region
        _
      $region20: #{model_forward.1} parent=11 // pred_fallthru
        _
      // Predicated region
      $region21: #{model_forward.1} parent=11 // pred_check
        %p182 = pneg %p114
      $region22: #{model_forward.1} parent=11 // pred_check_branch
        %184 = sbr.rel (%p182) target = $region24
      $region23: #{model_forward.1} parent=11 // pred_region
        _
      $region24: #{model_forward.1} parent=11 // pred_fallthru
        _
      // Predicated region
      $region25: #{model_forward.1} parent=11 // pred_check
        %p185 = pneg %p135
      $region26: #{model_forward.1} parent=11 // pred_check_branch
        %187 = sbr.rel (%p185) target = $region28
      $region27: #{model_forward.1} parent=11 // pred_region
        _
      $region28: #{model_forward.1} parent=11 // pred_fallthru
        _
    $region12: #{model_forward.1} parent=5 // pred_fallthru
      _
    %p188 = scmp.lt.s32.totalorder %s11, 3
    // Predicated region
    $region29: #{model_forward.1} parent=5 // pred_check
      %p189 = pneg %p188
    $region30: #{model_forward.1} parent=5 // pred_check_branch
      %191 = sbr.rel (%p189) target = $region32
    $region31: #{model_forward.1} parent=5 // pred_region
      // Predicated region
      $region33: #{model_forward.1} parent=31 // pred_check
        %p192 = pneg %p45
      $region34: #{model_forward.1} parent=31 // pred_check_branch
        %194 = sbr.rel (%p192) target = $region36
      $region35: #{model_forward.1} parent=31 // pred_region
        %s195 = smul.u32 3, %s19
        %p196 = scmp.lt.s32.totalorder %s195, 8
        %s197 = scalar_select %p196, %s195, 8
        %p198 = scmp.lt.s32.totalorder %s18, 0
        %s199 = scalar_select %p198, %s18, 0
        %s200 = sadd.s32 %s199, %s197
        %s201 = smul.addr %s200, 8
        %s202 = scalar_lea.vmem %s0, %s201
        %s203 = smul.u32 3, %s19
      $region36: #{model_forward.1} parent=31 // pred_fallthru
        _
    $region32: #{model_forward.1} parent=5 // pred_fallthru
      _
    %p204 = scmp.le.s32.totalorder 1, %s11
    %p205 = scmp.lt.s32.totalorder %s11, 4
    %p206 = pnand %p204, %p205
    %p207 = pneg %p206
    // Predicated region
    $region37: #{model_forward.1} parent=5 // pred_check
      _
    $region38: #{model_forward.1} parent=5 // pred_check_branch
      %209 = sbr.rel (%p206) target = $region40
    $region39: #{model_forward.1} parent=5 // pred_region
      %s210 = ssub.s32 %s11, 1
      %s211 = smul.u32 3, %s21
      %p212 = scmp.lt.s32.totalorder %s211, 8
      %s213 = scalar_select %p212, %s211, 8
      %p214 = scmp.lt.s32.totalorder %s20, 0
      %s215 = scalar_select %p214, %s20, 0
      %s216 = sadd.s32 %s215, %s213
      %s217 = smul.addr %s216, 8
      %s218 = scalar_lea.vmem %s0, %s217
      %p219 = pneg %p51
      %p220 = pneg %p48
      %p221 = pneg %p72
      %p222 = pneg %p69
      %p223 = pneg %p93
      %p224 = pneg %p90
      %p225 = pneg %p114
      %p226 = pneg %p111
      %p227 = pneg %p135
      %p228 = pneg %p132
      %p229 = pneg %p161
      %p230 = pneg %p158
      %p231 = scmp.lt.s32.totalorder %s20, 0
      %s232 = scalar_select %p231, %s20, 0
      %s233 = smul.addr %s232, 8
      %s234 = scalar_lea.vmem %s5, %s233
      %s235 = smul.u32 3, %s21
      %p236 = scmp.lt.s32.totalorder %s235, 8
      %s237 = scalar_select %p236, %s235, 8
      %p238 = scmp.lt.s32.totalorder %s20, 0
      %s239 = scalar_select %p238, %s20, 0
      %s240 = sadd.s32 %s239, %s237
      %s241 = smul.addr %s240, 8
      %s242 = scalar_lea.vmem %s0, %s241
      %s243 = smul.u32 3, %s21
      %p244 = scmp.lt.s32.totalorder %s20, 0
      %s245 = scalar_select %p244, %s20, 0
      %s246 = smul.addr %s245, 8
      %s247 = scalar_lea.vmem %s5, %s246
      %p248 = scmp.eq.s32.totalorder %s21, 0
      // Predicated region
      $region41: #{model_forward.1} parent=39 // pred_check
        %p249 = pneg %p248
      $region42: #{model_forward.1} parent=39 // pred_check_branch
        %251 = sbr.rel (%p249) target = $region44
      $region43: #{model_forward.1} parent=39 // pred_region
        %252 = vst [vmem:[#allocation3] sm:$0xff] 0.0
        %253 = vst [vmem:[#allocation4] sm:$0xff] 0.0
      $region44: #{model_forward.1} parent=39 // pred_fallthru
        _
      %v254 = vld [vmem:[%s242] sm:$0xff]
      %v255 = vld [vmem:[%s242 + $0x8] sm:$0xff]
      %v256 = vld [vmem:[%s242 + $0x10] sm:$0xff]
      %v257 = vlaneseq
      %v258 = vand.u32 %v257, 127
      %259 = vset.pattern.permute.xlu0 0
      %260 = vperm.xlu0 %259, %v254
      %v261 = vpop.permute.xlu0 %260
      %262 = vset.pattern.permute.xlu0 0
      %263 = vperm.xlu0 %262, %v255
      %v264 = vpop.permute.xlu0 %263
      %265 = vset.pattern.permute.xlu0 0
      %266 = vperm.xlu0 %265, %v256
      %v267 = vpop.permute.xlu0 %266
      %vm268 = vcmp.eq.s32.totalorder %v258, %v261
      %vm269 = vcmp.eq.s32.totalorder %v258, %v264
      %vm270 = vcmp.eq.s32.totalorder %v258, %v267
      %v271 = vsel %vm268, 1, 0
      %v272 = vsel %vm269, 1, 0
      %v273 = vsel %vm270, 1, 0
      %v274 = vcvt.s32.f32 %v271
      %v275 = vcvt.s32.f32 %v272
      %v276 = vcvt.s32.f32 %v273
      %v277 = vld [vmem:[%s1] sm:$0xff]
      %v278 = vld [vmem:[%s1 + $0x8] sm:$0xff]
      %v279 = vld [vmem:[%s1 + $0x10] sm:$0xff]
      %v280 = vld [vmem:[%s1 + $0x18] sm:$0xff]
      %v281 = vld [vmem:[%s1 + $0x20] sm:$0xff]
      %v282 = vld [vmem:[%s1 + $0x28] sm:$0xff]
      %v283 = vld [vmem:[%s1 + $0x30] sm:$0xff]
      %v284 = vld [vmem:[%s1 + $0x38] sm:$0xff]
      %v285 = vld [vmem:[%s1 + $0x40] sm:$0xff]
      %v286 = vld [vmem:[%s1 + $0x48] sm:$0xff]
      %v287 = vld [vmem:[%s1 + $0x50] sm:$0xff]
      %v288 = vld [vmem:[%s1 + $0x58] sm:$0xff]
      %v289 = vld [vmem:[%s1 + $0x60] sm:$0xff]
      %v290 = vld [vmem:[%s1 + $0x68] sm:$0xff]
      %v291 = vld [vmem:[%s1 + $0x70] sm:$0xff]
      %v292 = vld [vmem:[%s1 + $0x78] sm:$0xff]
      %293 = vmatpush.msra.mxu0 %v292
      %294 = vmatpush.msra.mxu0 %v291
      %295 = vmatpush.msra.mxu0 %v290
      %296 = vmatpush.msra.mxu0 %v289
      %297 = vmatpush.msra.mxu0 %v288
      %298 = vmatpush.msra.mxu0 %v287
      %299 = vmatpush.msra.mxu0 %v286
      %300 = vmatpush.msra.mxu0 %v285
      %301 = vmatpush.msra.mxu0 %v284
      %302 = vmatpush.msra.mxu0 %v283
      %303 = vmatpush.msra.mxu0 %v282
      %304 = vmatpush.msra.mxu0 %v281
      %305 = vmatpush.msra.mxu0 %v280
      %306 = vmatpush.msra.mxu0 %v279
      %307 = vmatpush.msra.mxu0 %v278
      %308 = vmatpush.msra.mxu0 %v277
      %309 = vmatmul.f32.gmra.mxu0 %v274
      %v310 = vpop.f32.mrf.mxu0
      %v311 = vadd.f32 0.0, %v310
      %312 = vmatmul.f32.gmra.mxu0 %v275
      %v313 = vpop.f32.mrf.mxu0
      %v314 = vadd.f32 0.0, %v313
      %315 = vmatmul.f32.gmra.mxu0 %v276
      %v316 = vpop.f32.mrf.mxu0
      %v317 = vadd.f32 0.0, %v316
      %318 = vdwg.mxu0
      %319 = vst [vmem:[#allocation2] sm:$0xff] %v311
      %320 = vst [vmem:[#allocation2 + $0x8] sm:$0xff] %v314
      %321 = vst [vmem:[#allocation2 + $0x10] sm:$0xff] %v317
      %v322 = vld [vmem:[%s2] sm:$0xff]
      %v323 = vld [vmem:[%s2 + $0x8] sm:$0xff]
      %v324 = vld [vmem:[%s2 + $0x10] sm:$0xff]
      %v325 = vld [vmem:[%s2 + $0x18] sm:$0xff]
      %v326 = vld [vmem:[%s2 + $0x20] sm:$0xff]
      %v327 = vld [vmem:[%s2 + $0x28] sm:$0xff]
      %v328 = vld [vmem:[%s2 + $0x30] sm:$0xff]
      %v329 = vld [vmem:[%s2 + $0x38] sm:$0xff]
      %v330 = vld [vmem:[%s2 + $0x40] sm:$0xff]
      %v331 = vld [vmem:[%s2 + $0x48] sm:$0xff]
      %v332 = vld [vmem:[%s2 + $0x50] sm:$0xff]
      %v333 = vld [vmem:[%s2 + $0x58] sm:$0xff]
      %v334 = vld [vmem:[%s2 + $0x60] sm:$0xff]
      %v335 = vld [vmem:[%s2 + $0x68] sm:$0xff]
      %v336 = vld [vmem:[%s2 + $0x70] sm:$0xff]
      %v337 = vld [vmem:[%s2 + $0x78] sm:$0xff]
      %v338 = vld [vmem:[#allocation3] sm:$0xff]
      %v339 = vld [vmem:[#allocation4] sm:$0xff]
      %v340 = vld [vmem:[#allocation2] sm:$0xff]
      %341 = vmatpush.msra.mxu0 %v337
      %342 = vmatpush.msra.mxu0 %v336
      %343 = vmatpush.msra.mxu0 %v335
      %344 = vmatpush.msra.mxu0 %v334
      %345 = vmatpush.msra.mxu0 %v333
      %346 = vmatpush.msra.mxu0 %v332
      %347 = vmatpush.msra.mxu0 %v331
      %348 = vmatpush.msra.mxu0 %v330
      %349 = vmatpush.msra.mxu0 %v329
      %350 = vmatpush.msra.mxu0 %v328
      %351 = vmatpush.msra.mxu0 %v327
      %352 = vmatpush.msra.mxu0 %v326
      %353 = vmatpush.msra.mxu0 %v325
      %354 = vmatpush.msra.mxu0 %v324
      %355 = vmatpush.msra.mxu0 %v323
      %356 = vmatpush.msra.mxu0 %v322
      %357 = vmatmul.f32.gmra.mxu0 %v338
      %v358 = vpop.f32.mrf.mxu0
      %v359 = vadd.f32 0.0, %v358
      %360 = vdwg.mxu0
      %v361 = vadd.f32 %v340, %v359
      %v362 = vtanh.pop %v361
      %s363 = smul.u32 %s21, 3
      %p364 = scmp.lt.s32.totalorder %s363, 8
      %s365 = scalar_select %p364, 1, 0
      %s366 = scvt.s32.f32 %s365
      %v367 = vstv %s366
      %v368 = vmul.f32 %v367, %v362
      %v369 = vadd.f32 %v339, %v368
      %s370 = scalar_lea.vmem [#allocation2], 8
      %v371 = vld [vmem:[%s370] sm:$0xff]
      %372 = vmatpush.msra.mxu0 %v337
      %373 = vmatpush.msra.mxu0 %v336
      %374 = vmatpush.msra.mxu0 %v335
      %375 = vmatpush.msra.mxu0 %v334
      %376 = vmatpush.msra.mxu0 %v333
      %377 = vmatpush.msra.mxu0 %v332
      %378 = vmatpush.msra.mxu0 %v331
      %379 = vmatpush.msra.mxu0 %v330
      %380 = vmatpush.msra.mxu0 %v329
      %381 = vmatpush.msra.mxu0 %v328
      %382 = vmatpush.msra.mxu0 %v327
      %383 = vmatpush.msra.mxu0 %v326
      %384 = vmatpush.msra.mxu0 %v325
      %385 = vmatpush.msra.mxu0 %v324
      %386 = vmatpush.msra.mxu0 %v323
      %387 = vmatpush.msra.mxu0 %v322
      %388 = vmatmul.f32.gmra.mxu0 %v362
      %v389 = vpop.f32.mrf.mxu0
      %v390 = vadd.f32 0.0, %v389
      %391 = vdwg.mxu0
      %v392 = vadd.f32 %v371, %v390
      %v393 = vtanh.pop %v392
      %s394 = sadd.s32 %s363, 1
      %p395 = scmp.lt.s32.totalorder %s394, 8
      %s396 = scalar_select %p395, 1, 0
      %s397 = scvt.s32.f32 %s396
      %v398 = vstv %s397
      %v399 = vmul.f32 %v398, %v393
      %v400 = vadd.f32 %v369, %v399
      %s401 = scalar_lea.vmem [#allocation2], 16
      %v402 = vld [vmem:[%s401] sm:$0xff]
      %403 = vmatpush.msra.mxu0 %v337
      %404 = vmatpush.msra.mxu0 %v336
      %405 = vmatpush.msra.mxu0 %v335
      %406 = vmatpush.msra.mxu0 %v334
      %407 = vmatpush.msra.mxu0 %v333
      %408 = vmatpush.msra.mxu0 %v332
      %409 = vmatpush.msra.mxu0 %v331
      %410 = vmatpush.msra.mxu0 %v330
      %411 = vmatpush.msra.mxu0 %v329
      %412 = vmatpush.msra.mxu0 %v328
      %413 = vmatpush.msra.mxu0 %v327
      %414 = vmatpush.msra.mxu0 %v326
      %415 = vmatpush.msra.mxu0 %v325
      %416 = vmatpush.msra.mxu0 %v324
      %417 = vmatpush.msra.mxu0 %v323
      %418 = vmatpush.msra.mxu0 %v322
      %419 = vmatmul.f32.gmra.mxu0 %v393
      %v420 = vpop.f32.mrf.mxu0
      %v421 = vadd.f32 0.0, %v420
      %422 = vdwg.mxu0
      %v423 = vadd.f32 %v402, %v421
      %v424 = vtanh.pop %v423
      %s425 = sadd.s32 %s363, 2
      %p426 = scmp.lt.s32.totalorder %s425, 8
      %s427 = scalar_select %p426, 1, 0
      %s428 = scvt.s32.f32 %s427
      %v429 = vstv %s428
      %v430 = vmul.f32 %v429, %v424
      %v431 = vadd.f32 %v400, %v430
      %432 = vst [vmem:[#allocation3] sm:$0xff] %v424
      %433 = vst [vmem:[#allocation4] sm:$0xff] %v431
      %p434 = scmp.eq.s32.totalorder %s21, 2
      // Predicated region
      $region45: #{model_forward.1} parent=39 // pred_check
        %p435 = pneg %p434
      $region46: #{model_forward.1} parent=39 // pred_check_branch
        %437 = sbr.rel (%p435) target = $region48
      $region47: #{model_forward.1} parent=39 // pred_region
        %v438 = vmul.f32 %v431, 0.125
        %v439 = vld [vmem:[%s3] sm:$0xff]
        %v440 = vld [vmem:[%s3 + $0x8] sm:$0xff]
        %v441 = vld [vmem:[%s3 + $0x10] sm:$0xff]
        %v442 = vld [vmem:[%s3 + $0x18] sm:$0xff]
        %v443 = vld [vmem:[%s3 + $0x20] sm:$0xff]
        %v444 = vld [vmem:[%s3 + $0x28] sm:$0xff]
        %v445 = vld [vmem:[%s3 + $0x30] sm:$0xff]
        %v446 = vld [vmem:[%s3 + $0x38] sm:$0xff]
        %v447 = vld [vmem:[%s3 + $0x40] sm:$0xff]
        %v448 = vld [vmem:[%s3 + $0x48] sm:$0xff]
        %v449 = vld [vmem:[%s3 + $0x50] sm:$0xff]
        %v450 = vld [vmem:[%s3 + $0x58] sm:$0xff]
        %v451 = vld [vmem:[%s3 + $0x60] sm:$0xff]
        %v452 = vld [vmem:[%s3 + $0x68] sm:$0xff]
        %v453 = vld [vmem:[%s3 + $0x70] sm:$0xff]
        %v454 = vld [vmem:[%s3 + $0x78] sm:$0xff]
        %v455 = vld [vmem:[%s4] sm:$0x1]
        %v457 = vperm.slane %v455, 0
        %459 = vmatpush.msra.mxu0 %v454
        %460 = vmatpush.msra.mxu0 %v453
        %461 = vmatpush.msra.mxu0 %v452
        %462 = vmatpush.msra.mxu0 %v451
        %463 = vmatpush.msra.mxu0 %v450
        %464 = vmatpush.msra.mxu0 %v449
        %465 = vmatpush.msra.mxu0 %v448
        %466 = vmatpush.msra.mxu0 %v447
        %467 = vmatpush.msra.mxu0 %v446
        %468 = vmatpush.msra.mxu0 %v445
        %469 = vmatpush.msra.mxu0 %v444
        %470 = vmatpush.msra.mxu0 %v443
        %471 = vmatpush.msra.mxu0 %v442
        %472 = vmatpush.msra.mxu0 %v441
        %473 = vmatpush.msra.mxu0 %v440
        %474 = vmatpush.msra.mxu0 %v439
        %475 = vmatmul.f32.gmra.mxu0 %v438
        %v476 = vpop.f32.mrf.mxu0
        %v477 = vadd.f32 %v457, %v476
        %478 = vdwg.mxu0
        %479 = vst [vmem:[%s247] sm:$0xff] %v477
      $region48: #{model_forward.1} parent=39 // pred_fallthru
        _
      %p480 = scmp.lt.s32.totalorder %s20, 0
      %s481 = scalar_select %p480, %s20, 0
      %s482 = smul.addr %s481, 8
      %s483 = scalar_lea.vmem %s5, %s482
      // Predicated region
      $region49: #{model_forward.1} parent=39 // pred_check
        %p484 = pneg %p158
      $region50: #{model_forward.1} parent=39 // pred_check_branch
        %486 = sbr.rel (%p484) target = $region52
      $region51: #{model_forward.1} parent=39 // pred_region
        _
      $region52: #{model_forward.1} parent=39 // pred_fallthru
        _
      // Predicated region
      $region53: #{model_forward.1} parent=39 // pred_check
        %p487 = pneg %p158
      $region54: #{model_forward.1} parent=39 // pred_check_branch
        %489 = sbr.rel (%p487) target = $region56
      $region55: #{model_forward.1} parent=39 // pred_region
        %p490 = scmp.lt.s32.totalorder %s20, 0
        %s491 = scalar_select %p490, %s20, 0
        %s492 = smul.addr %s491, 8
        %s493 = scalar_lea.vmem %s5, %s492
      $region56: #{model_forward.1} parent=39 // pred_fallthru
        _
    $region40: #{model_forward.1} parent=5 // pred_fallthru
      _
    %p494 = scmp.le.s32.totalorder 2, %s11
    // Predicated region
    $region57: #{model_forward.1} parent=5 // pred_check
      %p495 = pneg %p494
    $region58: #{model_forward.1} parent=5 // pred_check_branch
      %497 = sbr.rel (%p495) target = $region60
    $region59: #{model_forward.1} parent=5 // pred_region
      %s498 = ssub.s32 %s11, 2
    $region60: #{model_forward.1} parent=5 // pred_fallthru
      _
  $region6: #{model_forward.1} parent=0 // loop_footer
    %s15 = sadd.s32 1, %s11
  $region7: #{model_forward.1} parent=0 // loop_footer_branch
    %10 = sbr.rel target = $region3
  $region8: #{model_forward.1} parent=0 // loop_exit
    _

</llo_original>
